<compile_context>
chip_gen: v7x
topology: tpu7x:2x2x1
jax: 0.10.0
libtpu: 0.0.40
codegen_flags: <defaults>
</compile_context>

<pallas_src>
import functools

import jax
import jax.numpy as jnp
from jax.experimental import pallas as pl
from jax.experimental.pallas import tpu as pltpu

_LANES = 128
_SUBLANES_BF16 = 16


def _round_up(x, m):
    return -(-x // m) * m


def _geometry(h, w):
    """Padded width / flattened sizes: HW2 forced to a multiple of 128 lanes."""
    wpad = w + 2                      # minimum: left 1 + right 1 zero column
    while (h * wpad) % _LANES != 0:   # widen right pad until lane-dense
        wpad += 1
    hw2 = h * wpad                    # flattened output rows (junk cols >= w)
    p_flat = (h + 3) * wpad           # +1 top row, +2 bottom zero rows (slack)
    return wpad, hw2, p_flat


def _pad_flatten(x, cpad, wpad):
    """NCHW (n,c,h,w) -> (n, cpad, (h+3)*wpad) bf16, spatially zero padded."""
    n, c, h, w = x.shape
    xp = jnp.pad(x.astype(jnp.bfloat16),
                 ((0, 0), (0, cpad - c), (1, 2), (1, wpad - w - 1)))
    return xp.reshape(n, cpad, (h + 3) * wpad)


def _pack_weights(w_oihw, cins, cpads):
    """(Cout, sum(cins), 3, 3) OIHW -> (Cout, 9*sum(cpads)) bf16, tap-major."""
    cout = w_oihw.shape[0]
    parts, start = [], 0
    for cin_i, cp in zip(cins, cpads):
        wi = w_oihw[:, start:start + cin_i]
        parts.append(jnp.pad(wi, ((0, 0), (0, cp - cin_i), (0, 0), (0, 0))))
        start += cin_i
    wp = jnp.concatenate(parts, axis=1)          # (Cout, ctot, 3, 3)
    wp = jnp.transpose(wp, (0, 2, 3, 1))         # (Cout, 3, 3, ctot)
    return wp.reshape(cout, 9 * sum(cpads)).astype(jnp.bfloat16)


def _pick_nb(n):
    """Batch elems folded per grid step; keep >=2 parallel steps (v7x 2 TCs)."""
    return n // 2 if (n >= 2 and n % 2 == 0) else 1


# ----------------------------------------------------------------------------
# Generic fused-concat 3x3 "same" conv kernel (used by the dispatcher path).
# im2col is built in a bf16 VMEM scratch from contiguous windows of the
# row-flattened padded activations; one MXU matmul per grid step.
# ----------------------------------------------------------------------------
def _conv3x3_kernel(*refs, n_in, nb, tap_offsets, hw2, cpads, apply_relu):
    # refs = (x_flat_refs..., w_ref, b_ref, o_ref, xcol_ref)
    x_refs = refs[:n_in]
    w_ref, b_ref, o_ref, xcol_ref = refs[n_in:]
    ctot = sum(cpads)

    # In-VMEM im2col (bf16): each 3x3 tap of the padded image is a contiguous
    # window of the flattened activation. Lane-dense (hw2 % 128 == 0) stores,
    # 16-sublane-aligned rows.
    for b in range(nb):
        for k, off in enumerate(tap_offsets):
            row = k * ctot
            for x_ref, cp in zip(x_refs, cpads):
                xcol_ref[row:row + cp, b * hw2:(b + 1) * hw2] = \
                    x_ref[b, :, off:off + hw2]
                row += cp

    # Single fused matmul over K = 9*ctot and all folded batch columns.
    acc = jnp.dot(w_ref[...], xcol_ref[...], preferred_element_type=jnp.float32)
    acc = acc + b_ref[...]
    if apply_relu:
        acc = jnp.maximum(acc, 0.0)
    for b in range(nb):
        o_ref[b] = acc[:, b * hw2:(b + 1) * hw2].astype(o_ref.dtype)


@functools.partial(jax.jit, static_argnames=("apply_relu",))
def _conv3x3_nchw(inputs, w_oihw, bias, apply_relu):
    """3x3 stride-1 'same' conv over the channel-concat of `inputs` (NCHW)."""
    n, _, h, w = inputs[0].shape
    wpad, hw2, p_flat = _geometry(h, w)
    cins = [a.shape[1] for a in inputs]
    cpads = [_round_up(c, _SUBLANES_BF16) for c in cins]
    ctot = sum(cpads)
    cout = w_oihw.shape[0]
    nb = _pick_nb(n)
    grid_n = n // nb

    flats = [_pad_flatten(a, cp, wpad) for a, cp in zip(inputs, cpads)]
    w2 = _pack_weights(w_oihw, cins, cpads)
    b2 = bias.reshape(cout, 1).astype(jnp.float32)

    tap_offsets = tuple(dy * wpad + dx for dy in range(3) for dx in range(3))
    kernel = functools.partial(
        _conv3x3_kernel, n_in=len(inputs), nb=nb, tap_offsets=tap_offsets,
        hw2=hw2, cpads=tuple(cpads), apply_relu=apply_relu)

    in_specs = ([pl.BlockSpec((nb, cp, p_flat), lambda g: (g, 0, 0))
                 for cp in cpads]
                + [pl.BlockSpec((cout, 9 * ctot), lambda g: (0, 0)),
                   pl.BlockSpec((cout, 1), lambda g: (0, 0))])

    out = pl.pallas_call(
        kernel,
        out_shape=jax.ShapeDtypeStruct((n, cout, hw2), jnp.float32),
        grid=(grid_n,),
        in_specs=in_specs,
        out_specs=pl.BlockSpec((nb, cout, hw2), lambda g: (g, 0, 0)),
        scratch_shapes=[pltpu.VMEM((9 * ctot, nb * hw2), jnp.bfloat16)],
        compiler_params=pltpu.CompilerParams(
            dimension_semantics=("parallel",)),
    )(*flats, w2, b2)

    # Single crop of the flat-window junk columns (only per-call crop).
    return out.reshape(n, cout, h, wpad)[:, :, :, :w]


# ----------------------------------------------------------------------------
# Fully fused encoder+decoder kernel: conv3x3+ReLU, then conv3x3 over the
# channel-concat of [features, x], all inside one pallas_call.  The encoder
# features are masked (junk columns), re-padded and kept in a bf16 VMEM
# scratch — no HBM writeback, re-pad or re-read between the two convs.
# ----------------------------------------------------------------------------
def _unet_fused_kernel(x_ref, we_ref, be_ref, wd_ref, bd_ref, mask_ref,
                       y_ref, xcol_ref, hpad_ref, *,
                       nb, tap_offsets, hw2, wpad, cin_pad, cmid_pad):
    cdec = cmid_pad + cin_pad

    # ---- encoder: conv3x3(x) + bias + ReLU over all folded batch elems ----
    for b in range(nb):
        for k, off in enumerate(tap_offsets):
            xcol_ref[k * cin_pad:(k + 1) * cin_pad, b * hw2:(b + 1) * hw2] = \
                x_ref[b, :, off:off + hw2]
    feat = jnp.dot(we_ref[...], xcol_ref[:9 * cin_pad, :],
                   preferred_element_type=jnp.float32)
    feat = jnp.maximum(feat + be_ref[...], 0.0)        # (cmid_pad, nb*hw2) f32

    # Zero the wrapped-tap junk columns and re-pad the features in VMEM
    # (top/left 1, flat shift of wpad+1) for the decoder's 3x3 windows.
    hpad_ref[...] = jnp.zeros_like(hpad_ref)
    for b in range(nb):
        fb = feat[:, b * hw2:(b + 1) * hw2] * mask_ref[...]
        hpad_ref[b, :, wpad + 1:wpad + 1 + hw2] = fb.astype(hpad_ref.dtype)

    # ---- decoder: conv3x3(concat([features, x])) + bias ----
    for b in range(nb):
        for k, off in enumerate(tap_offsets):
            row = k * cdec
            xcol_ref[row:row + cmid_pad, b * hw2:(b + 1) * hw2] = \
                hpad_ref[b, :, off:off + hw2]
            xcol_ref[row + cmid_pad:row + cdec, b * hw2:(b + 1) * hw2] = \
                x_ref[b, :, off:off + hw2]
    acc = jnp.dot(wd_ref[...], xcol_ref[...], preferred_element_type=jnp.float32)
    acc = acc + bd_ref[...]
    for b in range(nb):
        y_ref[b] = acc[:, b * hw2:(b + 1) * hw2].astype(y_ref.dtype)


@jax.jit
def unet_fused(params, x):
    """Optimized full forward: decoder(encoder(x), x) in a single pallas_call."""
    n, cin, h, w = x.shape
    cmid = params["enc_w"].shape[0]
    cout = params["dec_w"].shape[0]
    wpad, hw2, p_flat = _geometry(h, w)
    cin_pad = _round_up(cin, _SUBLANES_BF16)
    cmid_pad = _round_up(cmid, _SUBLANES_BF16)
    cdec = cmid_pad + cin_pad
    nb = _pick_nb(n)
    grid_n = n // nb

    # x padded/flattened/bf16 exactly once for both convs.
    x_flat = _pad_flatten(x, cin_pad, wpad)

    we = _pack_weights(params["enc_w"], [cin], [cin_pad])
    we = jnp.pad(we, ((0, cmid_pad - cmid), (0, 0)))             # pad Cout rows
    be = jnp.pad(params["enc_b"].astype(jnp.float32),
                 (0, cmid_pad - cmid)).reshape(cmid_pad, 1)
    wd = _pack_weights(params["dec_w"], [cmid, cin], [cmid_pad, cin_pad])
    bd = params["dec_b"].reshape(cout, 1).astype(jnp.float32)

    # Valid-column mask (zeroes the flat-window junk columns of the features).
    col = jnp.arange(hw2, dtype=jnp.int32) % wpad
    mask = (col < w).astype(jnp.float32).reshape(1, hw2)

    tap_offsets = tuple(dy * wpad + dx for dy in range(3) for dx in range(3))
    kernel = functools.partial(
        _unet_fused_kernel, nb=nb, tap_offsets=tap_offsets, hw2=hw2,
        wpad=wpad, cin_pad=cin_pad, cmid_pad=cmid_pad)

    y = pl.pallas_call(
        kernel,
        out_shape=jax.ShapeDtypeStruct((n, cout, hw2), jnp.float32),
        grid=(grid_n,),
        in_specs=[
            pl.BlockSpec((nb, cin_pad, p_flat), lambda g: (g, 0, 0)),
            pl.BlockSpec((cmid_pad, 9 * cin_pad), lambda g: (0, 0)),
            pl.BlockSpec((cmid_pad, 1), lambda g: (0, 0)),
            pl.BlockSpec((cout, 9 * cdec), lambda g: (0, 0)),
            pl.BlockSpec((cout, 1), lambda g: (0, 0)),
            pl.BlockSpec((1, hw2), lambda g: (0, 0)),
        ],
        out_specs=pl.BlockSpec((nb, cout, hw2), lambda g: (g, 0, 0)),
        scratch_shapes=[
            pltpu.VMEM((9 * cdec, nb * hw2), jnp.bfloat16),   # shared im2col
            pltpu.VMEM((nb, cmid_pad, p_flat), jnp.bfloat16),  # padded features
        ],
        compiler_params=pltpu.CompilerParams(
            dimension_semantics=("parallel",)),
    )(x_flat, we, be, wd, bd, mask)

    # One crop for the whole forward pass.
    return y.reshape(n, cout, h, wpad)[:, :, :, :w]


# ----------------------------------------------------------------------------
# UNet forward dispatcher (mirrors the PyTorch module semantics exactly).
# NOTE: this two-call path re-pads x/h between calls; prefer `unet_fused`.
# ----------------------------------------------------------------------------
def unet_forward(params, x, resi=None, dir="encoder"):
    if dir == "encoder":
        h = _conv3x3_nchw([x], params["enc_w"], params["enc_b"],
                          apply_relu=True)
        return h, x                               # skip connection = input
    elif dir == "decoder":
        # Channel-concat of (features, skip) is fused inside the kernel.
        return _conv3x3_nchw([x, resi], params["dec_w"], params["dec_b"],
                             apply_relu=False)
    raise ValueError(f"unknown dir: {dir}")


def init_params(key, cin=4, cmid=8, cout=4):
    k1, k2, k3, k4 = jax.random.split(key, 4)
    scale_e = 1.0 / jnp.sqrt(9.0 * cin)
    scale_d = 1.0 / jnp.sqrt(9.0 * (cmid + cin))
    return {
        "enc_w": jax.random.normal(k1, (cmid, cin, 3, 3), jnp.float32) * scale_e,
        "enc_b": jax.random.normal(k2, (cmid,), jnp.float32) * 0.01,
        "dec_w": jax.random.normal(k3, (cout, cmid + cin, 3, 3),
                                   jnp.float32) * scale_d,
        "dec_b": jax.random.normal(k4, (cout,), jnp.float32) * 0.01,
    }


def _ref_conv_nchw(x_nchw, w_oihw, bias, apply_relu):
    # Reference uses the same bf16-operand / f32-accumulate precision.
    y = jax.lax.conv_general_dilated(
        x_nchw.astype(jnp.bfloat16), w_oihw.astype(jnp.bfloat16),
        window_strides=(1, 1), padding="SAME",
        dimension_numbers=("NCHW", "OIHW", "NCHW"),
        preferred_element_type=jnp.float32)
    y = y + bias[None, :, None, None]
    if apply_relu:
        y = jnp.maximum(y, 0.0)
    return y


if __name__ == "__main__":
    key = jax.random.PRNGKey(0)
    kp, kx = jax.random.split(key)
    params = init_params(kp, cin=4, cmid=8, cout=4)

    x = jax.random.normal(kx, (2, 4, 16, 16), jnp.float32)  # NCHW like PyTorch

    # Module-faithful dispatcher path (encoder call, then decoder call).
    h, resi = unet_forward(params, x, dir="encoder")
    h = jax.block_until_ready(h)
    y_disp = unet_forward(params, h, resi=resi, dir="decoder")
    y_disp = jax.block_until_ready(y_disp)

    # Optimized fused path (one pallas_call for the whole forward).
    y_fused = jax.block_until_ready(unet_fused(params, x))

    # Cross-check both paths against the XLA reference conv.
    h_ref = _ref_conv_nchw(x, params["enc_w"], params["enc_b"], True)
    y_ref = _ref_conv_nchw(jnp.concatenate([h, x], axis=1),
                           params["dec_w"], params["dec_b"], False)
    assert h.shape == (2, 8, 16, 16)
    assert y_disp.shape == (2, 4, 16, 16) and y_fused.shape == (2, 4, 16, 16)
    assert jnp.allclose(h, h_ref, rtol=1e-2, atol=1e-2), \
        float(jnp.max(jnp.abs(h - h_ref)))
    assert jnp.allclose(y_disp, y_ref, rtol=1e-2, atol=1e-2), \
        float(jnp.max(jnp.abs(y_disp - y_ref)))
    assert jnp.allclose(y_fused, y_ref, rtol=1e-2, atol=1e-2), \
        float(jnp.max(jnp.abs(y_fused - y_ref)))

    print("KERNEL_OK")
</pallas_src>

<mosaic_0001>
module attributes {stable_mosaic.version = 11 : i64} {
  func.func @_conv3x3_kernel(%arg0: i32, %arg1: memref<1x16x456xbf16, #tpu.memory_space<vmem>>, %arg2: memref<8x144xbf16, #tpu.memory_space<vmem>>, %arg3: memref<8x1xf32, #tpu.memory_space<vmem>>, %arg4: memref<1x8x384xf32, #tpu.memory_space<vmem>>, %arg5: memref<144x384xbf16, #tpu.memory_space<vmem>>) attributes {dimension_semantics = [#tpu.dimension_semantics<parallel>], iteration_bounds = array<i64: 2>, scalar_prefetch = 0 : i64, scratch_operands = 1 : i64, tpu.core_type = #tpu.core_type<tc>, window_params = [{transform_indices = @transform_0, window_bounds = array<i64: 1, 16, 456>}, {pipeline_mode = #tpu.pipeline_mode<synchronous>, transform_indices = @transform_1, window_bounds = array<i64: 8, 144>}, {pipeline_mode = #tpu.pipeline_mode<synchronous>, transform_indices = @transform_2, window_bounds = array<i64: 8, 1>}, {transform_indices = @transform_3, window_bounds = array<i64: 1, 8, 384>}]} {
    %c0 = arith.constant 0 : index
    %c0_0 = arith.constant 0 : index
    %c0_1 = arith.constant 0 : index
    %0 = vector.load %arg1[%c0, %c0_0, %c0_1] : memref<1x16x456xbf16, #tpu.memory_space<vmem>>, vector<1x16x384xbf16>
    %1 = vector.shape_cast %0 : vector<1x16x384xbf16> to vector<16x384xbf16>
    %c0_2 = arith.constant 0 : index
    %c0_3 = arith.constant 0 : index
    %2 = vector.load %arg5[%c0_2, %c0_3] : memref<144x384xbf16, #tpu.memory_space<vmem>>, vector<16x384xbf16>
    tpu.vector_store %arg5[%c0_2, %c0_3], %1 {strides = array<i32>} : memref<144x384xbf16, #tpu.memory_space<vmem>>, vector<16x384xbf16>,
    %c0_4 = arith.constant 0 : index
    %c0_5 = arith.constant 0 : index
    %c1 = arith.constant 1 : index
    %3 = vector.load %arg1[%c0_4, %c0_5, %c1] : memref<1x16x456xbf16, #tpu.memory_space<vmem>>, vector<1x16x384xbf16>
    %4 = vector.shape_cast %3 : vector<1x16x384xbf16> to vector<16x384xbf16>
    %c16 = arith.constant 16 : index
    %c0_6 = arith.constant 0 : index
    %5 = vector.load %arg5[%c16, %c0_6] : memref<144x384xbf16, #tpu.memory_space<vmem>>, vector<16x384xbf16>
    tpu.vector_store %arg5[%c16, %c0_6], %4 {strides = array<i32>} : memref<144x384xbf16, #tpu.memory_space<vmem>>, vector<16x384xbf16>,
    %c0_7 = arith.constant 0 : index
    %c0_8 = arith.constant 0 : index
    %c2 = arith.constant 2 : index
    %6 = vector.load %arg1[%c0_7, %c0_8, %c2] : memref<1x16x456xbf16, #tpu.memory_space<vmem>>, vector<1x16x384xbf16>
    %7 = vector.shape_cast %6 : vector<1x16x384xbf16> to vector<16x384xbf16>
    %c32 = arith.constant 32 : index
    %c0_9 = arith.constant 0 : index
    %8 = vector.load %arg5[%c32, %c0_9] : memref<144x384xbf16, #tpu.memory_space<vmem>>, vector<16x384xbf16>
    tpu.vector_store %arg5[%c32, %c0_9], %7 {strides = array<i32>} : memref<144x384xbf16, #tpu.memory_space<vmem>>, vector<16x384xbf16>,
    %c0_10 = arith.constant 0 : index
    %c0_11 = arith.constant 0 : index
    %c24 = arith.constant 24 : index
    %9 = vector.load %arg1[%c0_10, %c0_11, %c24] : memref<1x16x456xbf16, #tpu.memory_space<vmem>>, vector<1x16x384xbf16>
    %10 = vector.shape_cast %9 : vector<1x16x384xbf16> to vector<16x384xbf16>
    %c48 = arith.constant 48 : index
    %c0_12 = arith.constant 0 : index
    %11 = vector.load %arg5[%c48, %c0_12] : memref<144x384xbf16, #tpu.memory_space<vmem>>, vector<16x384xbf16>
    tpu.vector_store %arg5[%c48, %c0_12], %10 {strides = array<i32>} : memref<144x384xbf16, #tpu.memory_space<vmem>>, vector<16x384xbf16>,
    %c0_13 = arith.constant 0 : index
    %c0_14 = arith.constant 0 : index
    %c25 = arith.constant 25 : index
    %12 = vector.load %arg1[%c0_13, %c0_14, %c25] : memref<1x16x456xbf16, #tpu.memory_space<vmem>>, vector<1x16x384xbf16>
    %13 = vector.shape_cast %12 : vector<1x16x384xbf16> to vector<16x384xbf16>
    %c64 = arith.constant 64 : index
    %c0_15 = arith.constant 0 : index
    %14 = vector.load %arg5[%c64, %c0_15] : memref<144x384xbf16, #tpu.memory_space<vmem>>, vector<16x384xbf16>
    tpu.vector_store %arg5[%c64, %c0_15], %13 {strides = array<i32>} : memref<144x384xbf16, #tpu.memory_space<vmem>>, vector<16x384xbf16>,
    %c0_16 = arith.constant 0 : index
    %c0_17 = arith.constant 0 : index
    %c26 = arith.constant 26 : index
    %15 = vector.load %arg1[%c0_16, %c0_17, %c26] : memref<1x16x456xbf16, #tpu.memory_space<vmem>>, vector<1x16x384xbf16>
    %16 = vector.shape_cast %15 : vector<1x16x384xbf16> to vector<16x384xbf16>
    %c80 = arith.constant 80 : index
    %c0_18 = arith.constant 0 : index
    %17 = vector.load %arg5[%c80, %c0_18] : memref<144x384xbf16, #tpu.memory_space<vmem>>, vector<16x384xbf16>
    tpu.vector_store %arg5[%c80, %c0_18], %16 {strides = array<i32>} : memref<144x384xbf16, #tpu.memory_space<vmem>>, vector<16x384xbf16>,
    %c0_19 = arith.constant 0 : index
    %c0_20 = arith.constant 0 : index
    %c48_21 = arith.constant 48 : index
    %18 = vector.load %arg1[%c0_19, %c0_20, %c48_21] : memref<1x16x456xbf16, #tpu.memory_space<vmem>>, vector<1x16x384xbf16>
    %19 = vector.shape_cast %18 : vector<1x16x384xbf16> to vector<16x384xbf16>
    %c96 = arith.constant 96 : index
    %c0_22 = arith.constant 0 : index
    %20 = vector.load %arg5[%c96, %c0_22] : memref<144x384xbf16, #tpu.memory_space<vmem>>, vector<16x384xbf16>
    tpu.vector_store %arg5[%c96, %c0_22], %19 {strides = array<i32>} : memref<144x384xbf16, #tpu.memory_space<vmem>>, vector<16x384xbf16>,
    %c0_23 = arith.constant 0 : index
    %c0_24 = arith.constant 0 : index
    %c49 = arith.constant 49 : index
    %21 = vector.load %arg1[%c0_23, %c0_24, %c49] : memref<1x16x456xbf16, #tpu.memory_space<vmem>>, vector<1x16x384xbf16>
    %22 = vector.shape_cast %21 : vector<1x16x384xbf16> to vector<16x384xbf16>
    %c112 = arith.constant 112 : index
    %c0_25 = arith.constant 0 : index
    %23 = vector.load %arg5[%c112, %c0_25] : memref<144x384xbf16, #tpu.memory_space<vmem>>, vector<16x384xbf16>
    tpu.vector_store %arg5[%c112, %c0_25], %22 {strides = array<i32>} : memref<144x384xbf16, #tpu.memory_space<vmem>>, vector<16x384xbf16>,
    %c0_26 = arith.constant 0 : index
    %c0_27 = arith.constant 0 : index
    %c50 = arith.constant 50 : index
    %24 = vector.load %arg1[%c0_26, %c0_27, %c50] : memref<1x16x456xbf16, #tpu.memory_space<vmem>>, vector<1x16x384xbf16>
    %25 = vector.shape_cast %24 : vector<1x16x384xbf16> to vector<16x384xbf16>
    %c128 = arith.constant 128 : index
    %c0_28 = arith.constant 0 : index
    %26 = vector.load %arg5[%c128, %c0_28] : memref<144x384xbf16, #tpu.memory_space<vmem>>, vector<16x384xbf16>
    tpu.vector_store %arg5[%c128, %c0_28], %25 {strides = array<i32>} : memref<144x384xbf16, #tpu.memory_space<vmem>>, vector<16x384xbf16>,
    %c0_29 = arith.constant 0 : index
    %c0_30 = arith.constant 0 : index
    %27 = vector.load %arg2[%c0_29, %c0_30] : memref<8x144xbf16, #tpu.memory_space<vmem>>, vector<8x144xbf16>
    %c0_31 = arith.constant 0 : index
    %c0_32 = arith.constant 0 : index
    %28 = vector.load %arg5[%c0_31, %c0_32] : memref<144x384xbf16, #tpu.memory_space<vmem>>, vector<144x384xbf16>
    %cst = arith.constant dense<0.000000e+00> : vector<8x384xf32>
    %29 = tpu.matmul %27, %28, %cst {dimension_numbers = #tpu.dot_dimension_numbers<[1], [0], [0], [1], [0, 0, 1, 1], [], []>} : vector<8x144xbf16>, vector<144x384xbf16>, vector<8x384xf32> -> vector<8x384xf32>
    %c0_33 = arith.constant 0 : index
    %c0_34 = arith.constant 0 : index
    %30 = vector.load %arg3[%c0_33, %c0_34] : memref<8x1xf32, #tpu.memory_space<vmem>>, vector<8x1xf32>
    %31 = vector.broadcast %30 : vector<8x1xf32> to vector<8x384xf32>
    %32 = arith.addf %29, %31 : vector<8x384xf32>
    %cst_35 = arith.constant 0.000000e+00 : f32
    %33 = vector.broadcast %cst_35 : f32 to vector<8x384xf32>
    %34 = arith.maximumf %32, %33 : vector<8x384xf32>
    %c0_36 = arith.constant 0 : index
    %c0_37 = arith.constant 0 : index
    %c0_38 = arith.constant 0 : index
    %35 = vector.load %arg4[%c0_36, %c0_37, %c0_38] : memref<1x8x384xf32, #tpu.memory_space<vmem>>, vector<1x8x384xf32>
    %36 = vector.shape_cast %35 : vector<1x8x384xf32> to vector<8x384xf32>
    %37 = vector.shape_cast %34 : vector<8x384xf32> to vector<1x8x384xf32>
    tpu.vector_store %arg4[%c0_36, %c0_37, %c0_38], %37 {strides = array<i32>} : memref<1x8x384xf32, #tpu.memory_space<vmem>>, vector<1x8x384xf32>,
    return
  }
  func.func @transform_0(%arg0: i32) -> (i32, i32, i32) {
    %c0_i32 = arith.constant 0 : i32
    %c0_i32_0 = arith.constant 0 : i32
    %c0_i32_1 = arith.constant 0 : i32
    return %arg0, %c0_i32, %c0_i32_0 : i32, i32, i32
  }
  func.func @transform_1(%arg0: i32) -> (i32, i32) {
    %c0_i32 = arith.constant 0 : i32
    %c0_i32_0 = arith.constant 0 : i32
    %c0_i32_1 = arith.constant 0 : i32
    return %c0_i32, %c0_i32_0 : i32, i32
  }
  func.func @transform_2(%arg0: i32) -> (i32, i32) {
    %c0_i32 = arith.constant 0 : i32
    %c0_i32_0 = arith.constant 0 : i32
    %c0_i32_1 = arith.constant 0 : i32
    return %c0_i32, %c0_i32_0 : i32, i32
  }
  func.func @transform_3(%arg0: i32) -> (i32, i32, i32) {
    %c0_i32 = arith.constant 0 : i32
    %c0_i32_0 = arith.constant 0 : i32
    %c0_i32_1 = arith.constant 0 : i32
    return %arg0, %c0_i32, %c0_i32_0 : i32, i32, i32
  }
}

</mosaic_0001>

<llo_original>
// kernel: _conv3x3_nchw.1
$region0: #{_conv3x3_nchw.1}
  #allocation0 [shape = 'u32[]', space=smem, size = 0x4, offset = 0x4, fixed_abs, tag = 'smem constant byte address 0x4 - core index']
  #allocation1 [shape = 'u32[144,128]{1,0:T(1,128)}', space=vmem, size = 0x12000, scoped, tag = 'internal scratch']
  #allocation2 [shape = 'bf16[144,384]{1,0:T(16,128)(2,1)}', space=vmem, size = 0x1b000, scoped, tag = 'scratch operand']
  %s0 = inlined_call_operand.vmem [shape: bf16[2,16,456], index: 0, kind: input, shape index: {}]
  %s1 = inlined_call_operand.vmem [shape: bf16[8,144], index: 1, kind: input, shape index: {}]
  %s2 = inlined_call_operand.vmem [shape: f32[8,1], index: 2, kind: input, shape index: {}]
  %s3 = inlined_call_operand.vmem [shape: f32[2,8,384], index: 3, kind: output, shape index: {}]
  %s4 = sld [smem:[#allocation0]]
  $region45: #{_conv3x3_nchw.1} parent=0
    _
  %s6 = ssub.s32 1, %s4
  %s7 = scalar_select 0, %s6, %s4
  loop: start=0, step=1, limit=4
  $region2: #{_conv3x3_nchw.1} parent=0 // loop_pre_header
    _
  $region3: #{_conv3x3_nchw.1} parent=0 // loop_header
    %s9 = sphi 0, %s13
    %p10 = scmp.ge.s32.totalorder %s9, 4
    %s19 = sphi 0, %s21
    %s22 = sphi 0, %s19
    %s23 = sphi 0, %s22
    %s39 = sphi 0, %s23
    %s43 = sphi 0, %s43
    %s45 = sphi 0, %s43
    %s46 = sphi 0, %s45
    %s60 = sphi 0, %s46
    %s64 = sphi 0, %s64
    %s66 = sphi 0, %s64
    %s67 = sphi 0, %s66
    %s81 = sphi 0, %s67
    %s87 = sphi 0, %s89
    %s90 = sphi 0, %s87
    %s91 = sphi 0, %s90
    %s107 = sphi 0, %s91
  $region4: #{_conv3x3_nchw.1} parent=0 // loop_header_branch
    %12 = sbr.rel (%p10) target = $region8
  $region5: #{_conv3x3_nchw.1} parent=0 // loop_body
    %s14 = ssub.s32 %s9, 1
    %s15 = ssub.s32 %s9, 2
    %s16 = sadd.s32 %s9, 1
    %s17 = ssub.s32 %s9, %s16
    %p18 = scmp.eq.s32.totalorder %s17, 0
    %s20 = sadd.s32 %s19, 1
    %s21 = scalar_select %p18, %s19, %s20
    %p24 = pneg %p18
    %p25 = scmp.eq.s32.totalorder %s9, 1
    %p26 = por %p24, %p25
    %p27 = scmp.ne.s32.totalorder %s19, %s22
    %p28 = scmp.eq.s32.totalorder %s9, 0
    %p29 = por %p27, %p28
    %p30 = scmp.ne.s32.totalorder %s19, %s22
    %p31 = scmp.eq.s32.totalorder %s14, 1
    %p32 = por %p30, %p31
    %p33 = scmp.ne.s32.totalorder %s22, %s23
    %p34 = scmp.eq.s32.totalorder %s14, 0
    %p35 = por %p33, %p34
    %p36 = scmp.ne.s32.totalorder %s22, %s23
    %p37 = scmp.eq.s32.totalorder %s15, 1
    %p38 = por %p36, %p37
    %p40 = scmp.ne.s32.totalorder %s23, %s39
    %p41 = scmp.eq.s32.totalorder %s15, 0
    %p42 = por %p40, %p41
    %s44 = sadd.s32 %s43, 1
    %p47 = scmp.eq.s32.totalorder %s9, 1
    %p48 = scmp.ne.s32.totalorder %s43, %s45
    %p49 = scmp.eq.s32.totalorder %s9, 0
    %p50 = por %p48, %p49
    %p51 = scmp.ne.s32.totalorder %s43, %s45
    %p52 = scmp.eq.s32.totalorder %s14, 1
    %p53 = por %p51, %p52
    %p54 = scmp.ne.s32.totalorder %s45, %s46
    %p55 = scmp.eq.s32.totalorder %s14, 0
    %p56 = por %p54, %p55
    %p57 = scmp.ne.s32.totalorder %s45, %s46
    %p58 = scmp.eq.s32.totalorder %s15, 1
    %p59 = por %p57, %p58
    %p61 = scmp.ne.s32.totalorder %s46, %s60
    %p62 = scmp.eq.s32.totalorder %s15, 0
    %p63 = por %p61, %p62
    %s65 = sadd.s32 %s64, 1
    %p68 = scmp.eq.s32.totalorder %s9, 1
    %p69 = scmp.ne.s32.totalorder %s64, %s66
    %p70 = scmp.eq.s32.totalorder %s9, 0
    %p71 = por %p69, %p70
    %p72 = scmp.ne.s32.totalorder %s64, %s66
    %p73 = scmp.eq.s32.totalorder %s14, 1
    %p74 = por %p72, %p73
    %p75 = scmp.ne.s32.totalorder %s66, %s67
    %p76 = scmp.eq.s32.totalorder %s14, 0
    %p77 = por %p75, %p76
    %p78 = scmp.ne.s32.totalorder %s66, %s67
    %p79 = scmp.eq.s32.totalorder %s15, 1
    %p80 = por %p78, %p79
    %p82 = scmp.ne.s32.totalorder %s67, %s81
    %p83 = scmp.eq.s32.totalorder %s15, 0
    %p84 = por %p82, %p83
    %s85 = ssub.s32 %s9, %s16
    %p86 = scmp.eq.s32.totalorder %s85, 0
    %s88 = sadd.s32 %s87, 1
    %s89 = scalar_select %p86, %s87, %s88
    %p92 = pneg %p86
    %p93 = scmp.eq.s32.totalorder %s9, 1
    %p94 = por %p92, %p93
    %p95 = scmp.ne.s32.totalorder %s87, %s90
    %p96 = scmp.eq.s32.totalorder %s9, 0
    %p97 = por %p95, %p96
    %p98 = scmp.ne.s32.totalorder %s87, %s90
    %p99 = scmp.eq.s32.totalorder %s14, 1
    %p100 = por %p98, %p99
    %p101 = scmp.ne.s32.totalorder %s90, %s91
    %p102 = scmp.eq.s32.totalorder %s14, 0
    %p103 = por %p101, %p102
    %p104 = scmp.ne.s32.totalorder %s90, %s91
    %p105 = scmp.eq.s32.totalorder %s15, 1
    %p106 = por %p104, %p105
    %p108 = scmp.ne.s32.totalorder %s91, %s107
    %p109 = scmp.eq.s32.totalorder %s15, 0
    %p110 = por %p108, %p109
    %p111 = scmp.le.s32.totalorder 1, %s9
    %p112 = scmp.lt.s32.totalorder %s9, 3
    %p113 = pnand %p111, %p112
    %p114 = pneg %p113
    // Predicated region
    $region9: #{_conv3x3_nchw.1} parent=5 // pred_check
      _
    $region10: #{_conv3x3_nchw.1} parent=5 // pred_check_branch
      %116 = sbr.rel (%p113) target = $region12
    $region11: #{_conv3x3_nchw.1} parent=5 // pred_region
      %s117 = ssub.s32 %s9, 1
      // Predicated region
      $region13: #{_conv3x3_nchw.1} parent=11 // pred_check
        %p118 = pneg %p56
      $region14: #{_conv3x3_nchw.1} parent=11 // pred_check_branch
        %120 = sbr.rel (%p118) target = $region16
      $region15: #{_conv3x3_nchw.1} parent=11 // pred_region
        _
      $region16: #{_conv3x3_nchw.1} parent=11 // pred_fallthru
        _
      // Predicated region
      $region17: #{_conv3x3_nchw.1} parent=11 // pred_check
        %p121 = pneg %p77
      $region18: #{_conv3x3_nchw.1} parent=11 // pred_check_branch
        %123 = sbr.rel (%p121) target = $region20
      $region19: #{_conv3x3_nchw.1} parent=11 // pred_region
        _
      $region20: #{_conv3x3_nchw.1} parent=11 // pred_fallthru
        _
    $region12: #{_conv3x3_nchw.1} parent=5 // pred_fallthru
      _
    %p124 = scmp.lt.s32.totalorder %s9, 2
    // Predicated region
    $region21: #{_conv3x3_nchw.1} parent=5 // pred_check
      %p125 = pneg %p124
    $region22: #{_conv3x3_nchw.1} parent=5 // pred_check_branch
      %127 = sbr.rel (%p125) target = $region24
    $region23: #{_conv3x3_nchw.1} parent=5 // pred_region
      // Predicated region
      $region25: #{_conv3x3_nchw.1} parent=23 // pred_check
        %p128 = pneg %p29
      $region26: #{_conv3x3_nchw.1} parent=23 // pred_check_branch
        %130 = sbr.rel (%p128) target = $region28
      $region27: #{_conv3x3_nchw.1} parent=23 // pred_region
        %p131 = scmp.lt.s32.totalorder %s9, 1
        %s132 = scalar_select %p131, %s9, 1
        %s133 = smul.addr %s132, 8
        %s134 = smul.addr %s133, 4
        %s135 = scalar_lea.vmem %s0, %s134
      $region28: #{_conv3x3_nchw.1} parent=23 // pred_fallthru
        _
    $region24: #{_conv3x3_nchw.1} parent=5 // pred_fallthru
      _
    %p136 = scmp.le.s32.totalorder 1, %s9
    %p137 = scmp.lt.s32.totalorder %s9, 3
    %p138 = pnand %p136, %p137
    %p139 = pneg %p138
    // Predicated region
    $region29: #{_conv3x3_nchw.1} parent=5 // pred_check
      _
    $region30: #{_conv3x3_nchw.1} parent=5 // pred_check_branch
      %141 = sbr.rel (%p138) target = $region32
    $region31: #{_conv3x3_nchw.1} parent=5 // pred_region
      %s142 = ssub.s32 %s9, 1
      %p143 = scmp.lt.s32.totalorder %s14, 1
      %s144 = scalar_select %p143, %s14, 1
      %s145 = smul.addr %s144, 8
      %s146 = smul.addr %s145, 4
      %s147 = scalar_lea.vmem %s0, %s146
      %p148 = pneg %p35
      %p149 = pneg %p32
      %p150 = pneg %p56
      %p151 = pneg %p53
      %p152 = pneg %p77
      %p153 = pneg %p74
      %p154 = pneg %p103
      %p155 = pneg %p100
      %p156 = scmp.lt.s32.totalorder %s14, 1
      %s157 = scalar_select %p156, %s14, 1
      %s158 = smul.addr %s157, 3
      %s159 = smul.addr %s158, 8
      %s160 = scalar_lea.vmem %s3, %s159
      %p161 = scmp.lt.s32.totalorder %s14, 1
      %s162 = scalar_select %p161, %s14, 1
      %s163 = smul.addr %s162, 8
      %s164 = smul.addr %s163, 4
      %s165 = scalar_lea.vmem %s0, %s164
      %p166 = scmp.lt.s32.totalorder %s14, 1
      %s167 = scalar_select %p166, %s14, 1
      %s168 = smul.addr %s167, 3
      %s169 = smul.addr %s168, 8
      %s170 = scalar_lea.vmem %s3, %s169
      %v172 = vld [vmem:[%s165] sm:$0xff]
      %v173 = vld [vmem:[%s165 + $0x8] sm:$0xf]
      %v174 = vld [vmem:[%s165 + $0x10] sm:$0xff]
      %v175 = vld [vmem:[%s165 + $0x18] sm:$0xf]
      %v180 = vunpack.c.l.b16 %v172
      %v181 = vunpack.c.h.b16 %v172
      %v182 = vunpack.c.l.b16 %v173
      %v183 = vunpack.c.l.b16 %v174
      %v184 = vunpack.c.h.b16 %v174
      %v185 = vunpack.c.l.b16 %v175
      %v186 = vpack.c.b16 %v183, %v180
      %v187 = vpack.c.b16 %v184, %v181
      %v188 = vpack.c.b16 %v185, %v182
      %192 = vst [vmem:[#allocation2] sm:$0xff] %v186
      %193 = vst [vmem:[#allocation2 + $0x8] sm:$0xff] %v187
      %194 = vst [vmem:[#allocation2 + $0x10] sm:$0xff] %v188
      %v195 = vld [vmem:[%s165] sm:$0xff]
      %v196 = vld [vmem:[%s165 + $0x8] sm:$0xff]
      %v197 = vld [vmem:[%s165 + $0x10] sm:$0xff]
      %v198 = vld [vmem:[%s165 + $0x18] sm:$0xff]
      %v203 = vunpack.c.l.b16 %v195
      %v204 = vunpack.c.h.b16 %v195
      %v205 = vunpack.c.l.b16 %v196
      %v206 = vunpack.c.h.b16 %v196
      %v207 = vunpack.c.l.b16 %v197
      %v208 = vunpack.c.h.b16 %v197
      %v209 = vunpack.c.l.b16 %v198
      %v210 = vunpack.c.h.b16 %v198
      %v211 = vpack.c.b16 %v207, %v203
      %v212 = vpack.c.b16 %v208, %v204
      %v213 = vpack.c.b16 %v209, %v205
      %v214 = vpack.c.b16 %v210, %v206
      %215 = vrot.lane.b32.xlu0 %v211, 127
      %v216 = vpop.permute.xlu0 %215
      %217 = vrot.lane.b32.xlu0 %v212, 127
      %v218 = vpop.permute.xlu0 %217
      %219 = vrot.lane.b32.xlu0 %v213, 127
      %v220 = vpop.permute.xlu0 %219
      %221 = vrot.lane.b32.xlu0 %v214, 127
      %v222 = vpop.permute.xlu0 %221
      %vm223 = vcmask 1039360
      %v224 = vsel %vm223, %v216, %v218
      %v225 = vsel %vm223, %v218, %v220
      %v226 = vsel %vm223, %v220, %v222
      %230 = vst [vmem:[#allocation2 + $0x18] sm:$0xff] %v224
      %231 = vst [vmem:[#allocation2 + $0x20] sm:$0xff] %v225
      %232 = vst [vmem:[#allocation2 + $0x28] sm:$0xff] %v226
      %v233 = vld [vmem:[%s165] sm:$0xff]
      %v234 = vld [vmem:[%s165 + $0x8] sm:$0xff]
      %v235 = vld [vmem:[%s165 + $0x10] sm:$0xff]
      %v236 = vld [vmem:[%s165 + $0x18] sm:$0xff]
      %v241 = vunpack.c.l.b16 %v233
      %v242 = vunpack.c.h.b16 %v233
      %v243 = vunpack.c.l.b16 %v234
      %v244 = vunpack.c.h.b16 %v234
      %v245 = vunpack.c.l.b16 %v235
      %v246 = vunpack.c.h.b16 %v235
      %v247 = vunpack.c.l.b16 %v236
      %v248 = vunpack.c.h.b16 %v236
      %v249 = vpack.c.b16 %v245, %v241
      %v250 = vpack.c.b16 %v246, %v242
      %v251 = vpack.c.b16 %v247, %v243
      %v252 = vpack.c.b16 %v248, %v244
      %253 = vrot.lane.b32.xlu0 %v249, 126
      %v254 = vpop.permute.xlu0 %253
      %255 = vrot.lane.b32.xlu0 %v250, 126
      %v256 = vpop.permute.xlu0 %255
      %257 = vrot.lane.b32.xlu0 %v251, 126
      %v258 = vpop.permute.xlu0 %257
      %259 = vrot.lane.b32.xlu0 %v252, 126
      %v260 = vpop.permute.xlu0 %259
      %vm261 = vcmask 1031168
      %v262 = vsel %vm261, %v254, %v256
      %v263 = vsel %vm261, %v256, %v258
      %v264 = vsel %vm261, %v258, %v260
      %268 = vst [vmem:[#allocation2 + $0x30] sm:$0xff] %v262
      %269 = vst [vmem:[#allocation2 + $0x38] sm:$0xff] %v263
      %270 = vst [vmem:[#allocation2 + $0x40] sm:$0xff] %v264
      %v271 = vld [vmem:[%s165] sm:$0xff]
      %v272 = vld [vmem:[%s165 + $0x8] sm:$0xff]
      %v273 = vld [vmem:[%s165 + $0x10] sm:$0xff]
      %v274 = vld [vmem:[%s165 + $0x18] sm:$0xff]
      %v279 = vunpack.c.l.b16 %v271
      %v280 = vunpack.c.h.b16 %v271
      %v281 = vunpack.c.l.b16 %v272
      %v282 = vunpack.c.h.b16 %v272
      %v283 = vunpack.c.l.b16 %v273
      %v284 = vunpack.c.h.b16 %v273
      %v285 = vunpack.c.l.b16 %v274
      %v286 = vunpack.c.h.b16 %v274
      %v287 = vpack.c.b16 %v283, %v279
      %v288 = vpack.c.b16 %v284, %v280
      %v289 = vpack.c.b16 %v285, %v281
      %v290 = vpack.c.b16 %v286, %v282
      %291 = vrot.lane.b32.xlu0 %v287, 104
      %v292 = vpop.permute.xlu0 %291
      %293 = vrot.lane.b32.xlu0 %v288, 104
      %v294 = vpop.permute.xlu0 %293
      %295 = vrot.lane.b32.xlu0 %v289, 104
      %v296 = vpop.permute.xlu0 %295
      %297 = vrot.lane.b32.xlu0 %v290, 104
      %v298 = vpop.permute.xlu0 %297
      %vm299 = vcmask 850944
      %v300 = vsel %vm299, %v292, %v294
      %v301 = vsel %vm299, %v294, %v296
      %v302 = vsel %vm299, %v296, %v298
      %306 = vst [vmem:[#allocation2 + $0x48] sm:$0xff] %v300
      %307 = vst [vmem:[#allocation2 + $0x50] sm:$0xff] %v301
      %308 = vst [vmem:[#allocation2 + $0x58] sm:$0xff] %v302
      %v309 = vld [vmem:[%s165] sm:$0xff]
      %v310 = vld [vmem:[%s165 + $0x8] sm:$0xff]
      %v311 = vld [vmem:[%s165 + $0x10] sm:$0xff]
      %v312 = vld [vmem:[%s165 + $0x18] sm:$0xff]
      %v317 = vunpack.c.l.b16 %v309
      %v318 = vunpack.c.h.b16 %v309
      %v319 = vunpack.c.l.b16 %v310
      %v320 = vunpack.c.h.b16 %v310
      %v321 = vunpack.c.l.b16 %v311
      %v322 = vunpack.c.h.b16 %v311
      %v323 = vunpack.c.l.b16 %v312
      %v324 = vunpack.c.h.b16 %v312
      %v325 = vpack.c.b16 %v321, %v317
      %v326 = vpack.c.b16 %v322, %v318
      %v327 = vpack.c.b16 %v323, %v319
      %v328 = vpack.c.b16 %v324, %v320
      %329 = vrot.lane.b32.xlu0 %v325, 103
      %v330 = vpop.permute.xlu0 %329
      %331 = vrot.lane.b32.xlu0 %v326, 103
      %v332 = vpop.permute.xlu0 %331
      %333 = vrot.lane.b32.xlu0 %v327, 103
      %v334 = vpop.permute.xlu0 %333
      %335 = vrot.lane.b32.xlu0 %v328, 103
      %v336 = vpop.permute.xlu0 %335
      %vm337 = vcmask 842752
      %v338 = vsel %vm337, %v330, %v332
      %v339 = vsel %vm337, %v332, %v334
      %v340 = vsel %vm337, %v334, %v336
      %344 = vst [vmem:[#allocation2 + $0x60] sm:$0xff] %v338
      %345 = vst [vmem:[#allocation2 + $0x68] sm:$0xff] %v339
      %346 = vst [vmem:[#allocation2 + $0x70] sm:$0xff] %v340
      %v347 = vld [vmem:[%s165] sm:$0xff]
      %v348 = vld [vmem:[%s165 + $0x8] sm:$0xff]
      %v349 = vld [vmem:[%s165 + $0x10] sm:$0xff]
      %v350 = vld [vmem:[%s165 + $0x18] sm:$0xff]
      %v355 = vunpack.c.l.b16 %v347
      %v356 = vunpack.c.h.b16 %v347
      %v357 = vunpack.c.l.b16 %v348
      %v358 = vunpack.c.h.b16 %v348
      %v359 = vunpack.c.l.b16 %v349
      %v360 = vunpack.c.h.b16 %v349
      %v361 = vunpack.c.l.b16 %v350
      %v362 = vunpack.c.h.b16 %v350
      %v363 = vpack.c.b16 %v359, %v355
      %v364 = vpack.c.b16 %v360, %v356
      %v365 = vpack.c.b16 %v361, %v357
      %v366 = vpack.c.b16 %v362, %v358
      %367 = vrot.lane.b32.xlu0 %v363, 102
      %v368 = vpop.permute.xlu0 %367
      %369 = vrot.lane.b32.xlu0 %v364, 102
      %v370 = vpop.permute.xlu0 %369
      %371 = vrot.lane.b32.xlu0 %v365, 102
      %v372 = vpop.permute.xlu0 %371
      %373 = vrot.lane.b32.xlu0 %v366, 102
      %v374 = vpop.permute.xlu0 %373
      %vm375 = vcmask 834560
      %v376 = vsel %vm375, %v368, %v370
      %v377 = vsel %vm375, %v370, %v372
      %v378 = vsel %vm375, %v372, %v374
      %382 = vst [vmem:[#allocation2 + $0x78] sm:$0xff] %v376
      %383 = vst [vmem:[#allocation2 + $0x80] sm:$0xff] %v377
      %384 = vst [vmem:[#allocation2 + $0x88] sm:$0xff] %v378
      %v385 = vld [vmem:[%s165] sm:$0xff]
      %v386 = vld [vmem:[%s165 + $0x8] sm:$0xff]
      %v387 = vld [vmem:[%s165 + $0x10] sm:$0xff]
      %v388 = vld [vmem:[%s165 + $0x18] sm:$0xff]
      %v393 = vunpack.c.l.b16 %v385
      %v394 = vunpack.c.h.b16 %v385
      %v395 = vunpack.c.l.b16 %v386
      %v396 = vunpack.c.h.b16 %v386
      %v397 = vunpack.c.l.b16 %v387
      %v398 = vunpack.c.h.b16 %v387
      %v399 = vunpack.c.l.b16 %v388
      %v400 = vunpack.c.h.b16 %v388
      %v401 = vpack.c.b16 %v397, %v393
      %v402 = vpack.c.b16 %v398, %v394
      %v403 = vpack.c.b16 %v399, %v395
      %v404 = vpack.c.b16 %v400, %v396
      %405 = vrot.lane.b32.xlu0 %v401, 80
      %v406 = vpop.permute.xlu0 %405
      %407 = vrot.lane.b32.xlu0 %v402, 80
      %v408 = vpop.permute.xlu0 %407
      %409 = vrot.lane.b32.xlu0 %v403, 80
      %v410 = vpop.permute.xlu0 %409
      %411 = vrot.lane.b32.xlu0 %v404, 80
      %v412 = vpop.permute.xlu0 %411
      %vm413 = vcmask 654336
      %v414 = vsel %vm413, %v406, %v408
      %v415 = vsel %vm413, %v408, %v410
      %v416 = vsel %vm413, %v410, %v412
      %420 = vst [vmem:[#allocation2 + $0x90] sm:$0xff] %v414
      %421 = vst [vmem:[#allocation2 + $0x98] sm:$0xff] %v415
      %422 = vst [vmem:[#allocation2 + $0xa0] sm:$0xff] %v416
      %v423 = vld [vmem:[%s165] sm:$0xff]
      %v424 = vld [vmem:[%s165 + $0x8] sm:$0xff]
      %v425 = vld [vmem:[%s165 + $0x10] sm:$0xff]
      %v426 = vld [vmem:[%s165 + $0x18] sm:$0xff]
      %v431 = vunpack.c.l.b16 %v423
      %v432 = vunpack.c.h.b16 %v423
      %v433 = vunpack.c.l.b16 %v424
      %v434 = vunpack.c.h.b16 %v424
      %v435 = vunpack.c.l.b16 %v425
      %v436 = vunpack.c.h.b16 %v425
      %v437 = vunpack.c.l.b16 %v426
      %v438 = vunpack.c.h.b16 %v426
      %v439 = vpack.c.b16 %v435, %v431
      %v440 = vpack.c.b16 %v436, %v432
      %v441 = vpack.c.b16 %v437, %v433
      %v442 = vpack.c.b16 %v438, %v434
      %443 = vrot.lane.b32.xlu0 %v439, 79
      %v444 = vpop.permute.xlu0 %443
      %445 = vrot.lane.b32.xlu0 %v440, 79
      %v446 = vpop.permute.xlu0 %445
      %447 = vrot.lane.b32.xlu0 %v441, 79
      %v448 = vpop.permute.xlu0 %447
      %449 = vrot.lane.b32.xlu0 %v442, 79
      %v450 = vpop.permute.xlu0 %449
      %vm451 = vcmask 646144
      %v452 = vsel %vm451, %v444, %v446
      %v453 = vsel %vm451, %v446, %v448
      %v454 = vsel %vm451, %v448, %v450
      %458 = vst [vmem:[#allocation2 + $0xa8] sm:$0xff] %v452
      %459 = vst [vmem:[#allocation2 + $0xb0] sm:$0xff] %v453
      %460 = vst [vmem:[#allocation2 + $0xb8] sm:$0xff] %v454
      %v461 = vld [vmem:[%s165] sm:$0xff]
      %v462 = vld [vmem:[%s165 + $0x8] sm:$0xff]
      %v463 = vld [vmem:[%s165 + $0x10] sm:$0xff]
      %v464 = vld [vmem:[%s165 + $0x18] sm:$0xff]
      %v469 = vunpack.c.l.b16 %v461
      %v470 = vunpack.c.h.b16 %v461
      %v471 = vunpack.c.l.b16 %v462
      %v472 = vunpack.c.h.b16 %v462
      %v473 = vunpack.c.l.b16 %v463
      %v474 = vunpack.c.h.b16 %v463
      %v475 = vunpack.c.l.b16 %v464
      %v476 = vunpack.c.h.b16 %v464
      %v477 = vpack.c.b16 %v473, %v469
      %v478 = vpack.c.b16 %v474, %v470
      %v479 = vpack.c.b16 %v475, %v471
      %v480 = vpack.c.b16 %v476, %v472
      %481 = vrot.lane.b32.xlu0 %v477, 78
      %v482 = vpop.permute.xlu0 %481
      %483 = vrot.lane.b32.xlu0 %v478, 78
      %v484 = vpop.permute.xlu0 %483
      %485 = vrot.lane.b32.xlu0 %v479, 78
      %v486 = vpop.permute.xlu0 %485
      %487 = vrot.lane.b32.xlu0 %v480, 78
      %v488 = vpop.permute.xlu0 %487
      %vm489 = vcmask 637952
      %v490 = vsel %vm489, %v482, %v484
      %v491 = vsel %vm489, %v484, %v486
      %v492 = vsel %vm489, %v486, %v488
      %496 = vst [vmem:[#allocation2 + $0xc0] sm:$0xff] %v490
      %497 = vst [vmem:[#allocation2 + $0xc8] sm:$0xff] %v491
      %498 = vst [vmem:[#allocation2 + $0xd0] sm:$0xff] %v492
      %v499 = vld [vmem:[%s1] sm:$0xff]
      %v500 = vld [vmem:[#allocation2] sm:$0xff]
      %v501 = vld [vmem:[#allocation2 + $0x8] sm:$0xff]
      %v502 = vld [vmem:[#allocation2 + $0x10] sm:$0xff]
      %v503 = vld [vmem:[#allocation2 + $0x18] sm:$0xff]
      %v504 = vld [vmem:[#allocation2 + $0x20] sm:$0xff]
      %v505 = vld [vmem:[#allocation2 + $0x28] sm:$0xff]
      %v506 = vld [vmem:[#allocation2 + $0x30] sm:$0xff]
      %v507 = vld [vmem:[#allocation2 + $0x38] sm:$0xff]
      %v508 = vld [vmem:[#allocation2 + $0x40] sm:$0xff]
      %v509 = vld [vmem:[#allocation2 + $0x48] sm:$0xff]
      %v510 = vld [vmem:[#allocation2 + $0x50] sm:$0xff]
      %v511 = vld [vmem:[#allocation2 + $0x58] sm:$0xff]
      %v512 = vld [vmem:[#allocation2 + $0x60] sm:$0xff]
      %v513 = vld [vmem:[#allocation2 + $0x68] sm:$0xff]
      %v514 = vld [vmem:[#allocation2 + $0x70] sm:$0xff]
      %v515 = vld [vmem:[#allocation2 + $0x78] sm:$0xff]
      %v516 = vld [vmem:[#allocation2 + $0x80] sm:$0xff]
      %v517 = vld [vmem:[#allocation2 + $0x88] sm:$0xff]
      %v518 = vld [vmem:[#allocation2 + $0x90] sm:$0xff]
      %v519 = vld [vmem:[#allocation2 + $0x98] sm:$0xff]
      %v520 = vld [vmem:[#allocation2 + $0xa0] sm:$0xff]
      %v521 = vld [vmem:[#allocation2 + $0xa8] sm:$0xff]
      %v522 = vld [vmem:[#allocation2 + $0xb0] sm:$0xff]
      %v523 = vld [vmem:[#allocation2 + $0xb8] sm:$0xff]
      %v524 = vld [vmem:[#allocation2 + $0xc0] sm:$0xff]
      %v525 = vld [vmem:[#allocation2 + $0xc8] sm:$0xff]
      %v526 = vld [vmem:[#allocation2 + $0xd0] sm:$0xff]
      %v527 = vld [vmem:[%s2] sm:$0xff]
      %529 = vset.pattern.permute.xlu0 0
      %530 = vperm.xlu0 %529, %v527
      %v531 = vpop.permute.xlu0 %530
      %v534 = vunpack.c.l.b16 %v499
      %v535 = vunpack.c.h.b16 %v499
      %v536 = vpack.c.b16 %v534, %v534
      %v537 = vpack.c.b16 %v535, %v535
      %vm539 = vcmask 130048
      %v541 = vsel %vm539, %v537, 0
      %543 = vmatprep.subr.bf16.mxu0 %v501
      %544 = vmatpush1.bf16.msra.mxu0 %v500
      %545 = vmatprep.subr.bf16.mxu0 %v504
      %546 = vmatpush1.bf16.msra.mxu0 %v503
      %547 = vmatprep.subr.bf16.mxu0 %v507
      %548 = vmatpush1.bf16.msra.mxu0 %v506
      %549 = vmatprep.subr.bf16.mxu0 %v510
      %550 = vmatpush1.bf16.msra.mxu0 %v509
      %551 = vmatprep.subr.bf16.mxu0 %v513
      %552 = vmatpush1.bf16.msra.mxu0 %v512
      %553 = vmatprep.subr.bf16.mxu0 %v516
      %554 = vmatpush1.bf16.msra.mxu0 %v515
      %555 = vmatprep.subr.bf16.mxu0 %v519
      %556 = vmatpush1.bf16.msra.mxu0 %v518
      %557 = vmatprep.subr.bf16.mxu0 %v522
      %558 = vmatpush1.bf16.msra.mxu0 %v521
      %559 = vmatprep.subr.bf16.mxu0 %v525
      %560 = vmatpush1.bf16.msra.mxu0 %v524
      %561 = vmatprep.subr.bf16.mxu0 0
      %562 = vmatpush1.bf16.msra.mxu0 0
      %563 = vmatprep.subr.bf16.mxu0 0
      %564 = vmatpush1.bf16.msra.mxu0 0
      %565 = vmatprep.subr.bf16.mxu0 0
      %566 = vmatpush1.bf16.msra.mxu0 0
      %567 = vmatprep.subr.bf16.mxu0 0
      %568 = vmatpush1.bf16.msra.mxu0 0
      %569 = vmatprep.subr.bf16.mxu0 0
      %570 = vmatpush1.bf16.msra.mxu0 0
      %571 = vmatprep.subr.bf16.mxu0 0
      %572 = vmatpush1.bf16.msra.mxu0 0
      %573 = vmatprep.subr.bf16.mxu0 0
      %574 = vmatpush1.bf16.msra.mxu0 0
      %575 = vmatprep.mubr.bf16.mxu0 %v541
      %576 = vmatmul.mubr.bf16.gmra.mrb[0].mxu0 %v536
      %v577 = vpop.f32.mrb[0].mxu0
      %v578 = vadd.f32 %v531, %v577
      %v579 = vpop.f32.mrb[0].mxu0
      %v580 = vadd.f32 %v531, %v579
      %v581 = vpop.f32.mrb[0].mxu0
      %v582 = vpop.f32.mrb[0].mxu0
      %583 = vdwg.mxu0
      %584 = vmatprep.subr.bf16.mxu0 0
      %585 = vmatpush1.bf16.msra.mxu0 %v502
      %586 = vmatprep.subr.bf16.mxu0 0
      %587 = vmatpush1.bf16.msra.mxu0 %v505
      %588 = vmatprep.subr.bf16.mxu0 0
      %589 = vmatpush1.bf16.msra.mxu0 %v508
      %590 = vmatprep.subr.bf16.mxu0 0
      %591 = vmatpush1.bf16.msra.mxu0 %v511
      %592 = vmatprep.subr.bf16.mxu0 0
      %593 = vmatpush1.bf16.msra.mxu0 %v514
      %594 = vmatprep.subr.bf16.mxu0 0
      %595 = vmatpush1.bf16.msra.mxu0 %v517
      %596 = vmatprep.subr.bf16.mxu0 0
      %597 = vmatpush1.bf16.msra.mxu0 %v520
      %598 = vmatprep.subr.bf16.mxu0 0
      %599 = vmatpush1.bf16.msra.mxu0 %v523
      %600 = vmatprep.subr.bf16.mxu0 0
      %601 = vmatpush1.bf16.msra.mxu0 %v526
      %602 = vmatprep.subr.bf16.mxu0 0
      %603 = vmatpush1.bf16.msra.mxu0 0
      %604 = vmatprep.subr.bf16.mxu0 0
      %605 = vmatpush1.bf16.msra.mxu0 0
      %606 = vmatprep.subr.bf16.mxu0 0
      %607 = vmatpush1.bf16.msra.mxu0 0
      %608 = vmatprep.subr.bf16.mxu0 0
      %609 = vmatpush1.bf16.msra.mxu0 0
      %610 = vmatprep.subr.bf16.mxu0 0
      %611 = vmatpush1.bf16.msra.mxu0 0
      %612 = vmatprep.subr.bf16.mxu0 0
      %613 = vmatpush1.bf16.msra.mxu0 0
      %614 = vmatprep.subr.bf16.mxu0 0
      %615 = vmatpush1.bf16.msra.mxu0 0
      %616 = vmatprep.mubr.bf16.mxu0 %v541
      %617 = vmatmul.mubr.bf16.gmra.mrb[0].mxu0 %v536
      %v618 = vpop.f32.mrb[0].mxu0
      %v619 = vadd.f32 %v531, %v618
      %v620 = vpop.f32.mrb[0].mxu0
      %v621 = vpop.f32.mrb[0].mxu0
      %v622 = vpop.f32.mrb[0].mxu0
      %623 = vdwg.mxu0
      %v624 = vmax.f32 %v578, 0.0
      %v625 = vmax.f32 %v580, 0.0
      %v626 = vmax.f32 %v619, 0.0
      %627 = vst [vmem:[%s170] sm:$0xff] %v624
      %628 = vst [vmem:[%s170 + $0x8] sm:$0xff] %v625
      %629 = vst [vmem:[%s170 + $0x10] sm:$0xff] %v626
      %p630 = scmp.lt.s32.totalorder %s14, 1
      %s631 = scalar_select %p630, %s14, 1
      %s632 = smul.addr %s631, 3
      %s633 = smul.addr %s632, 8
      %s634 = scalar_lea.vmem %s3, %s633
      // Predicated region
      $region33: #{_conv3x3_nchw.1} parent=31 // pred_check
        %p635 = pneg %p100
      $region34: #{_conv3x3_nchw.1} parent=31 // pred_check_branch
        %637 = sbr.rel (%p635) target = $region36
      $region35: #{_conv3x3_nchw.1} parent=31 // pred_region
        _
      $region36: #{_conv3x3_nchw.1} parent=31 // pred_fallthru
        _
    $region32: #{_conv3x3_nchw.1} parent=5 // pred_fallthru
      _
    %p638 = scmp.le.s32.totalorder 2, %s9
    // Predicated region
    $region37: #{_conv3x3_nchw.1} parent=5 // pred_check
      %p639 = pneg %p638
    $region38: #{_conv3x3_nchw.1} parent=5 // pred_check_branch
      %641 = sbr.rel (%p639) target = $region40
    $region39: #{_conv3x3_nchw.1} parent=5 // pred_region
      %s642 = ssub.s32 %s9, 2
      // Predicated region
      $region41: #{_conv3x3_nchw.1} parent=39 // pred_check
        %p643 = pneg %p106
      $region42: #{_conv3x3_nchw.1} parent=39 // pred_check_branch
        %645 = sbr.rel (%p643) target = $region44
      $region43: #{_conv3x3_nchw.1} parent=39 // pred_region
        %p646 = scmp.lt.s32.totalorder %s15, 1
        %s647 = scalar_select %p646, %s15, 1
        %s648 = smul.addr %s647, 3
        %s649 = smul.addr %s648, 8
        %s650 = scalar_lea.vmem %s3, %s649
      $region44: #{_conv3x3_nchw.1} parent=39 // pred_fallthru
        _
    $region40: #{_conv3x3_nchw.1} parent=5 // pred_fallthru
      _
  $region6: #{_conv3x3_nchw.1} parent=0 // loop_footer
    %s13 = sadd.s32 1, %s9
  $region7: #{_conv3x3_nchw.1} parent=0 // loop_footer_branch
    %8 = sbr.rel target = $region3
  $region8: #{_conv3x3_nchw.1} parent=0 // loop_exit
    _

</llo_original>
